<compile_context>
chip_gen: v7x
topology: tpu7x:2x2x1
jax: 0.10.0
libtpu: 0.0.40
codegen_flags: <defaults>
</compile_context>

<pallas_src>
import functools

import jax
import jax.numpy as jnp
from jax import lax
from jax.experimental import pallas as pl
from jax.experimental.pallas import tpu as pltpu

GAMMA = 2.0  # module default; implemented below as an explicit square.


def _round_up(x, m):
    return ((x + m - 1) // m) * m


def _focal_loss_kernel(logits_ref, target_ref, out_ref, acc_ref, *,
                       n_valid, c_valid, inv_n):
    i = pl.program_id(0)

    @pl.when(i == 0)
    def _init():
        acc_ref[0] = jnp.float32(0.0)

    x = logits_ref[...].astype(jnp.float32)              # [tn, c_pad]
    tgt = target_ref[...]                                 # [tn, 1] int32
    tn, cdim = x.shape

    col_ids = lax.broadcasted_iota(jnp.int32, (tn, cdim), 1)
    class_ok = col_ids < c_valid                           # mask padded lanes

    # numerically stable logsumexp over the (padded) class axis
    neg_big = jnp.float32(-1e30)
    xm = jnp.where(class_ok, x, neg_big)
    row_max = jnp.max(xm, axis=1, keepdims=True)           # [tn, 1]
    shifted = xm - row_max
    sum_exp = jnp.sum(jnp.where(class_ok, jnp.exp(shifted), 0.0),
                      axis=1, keepdims=True)               # [tn, 1]
    lse = jnp.log(sum_exp)                                 # [tn, 1]

    # one-hot gather of the target class (vectorized compare + XLU reduce)
    onehot = (col_ids == tgt).astype(jnp.float32)          # [tn, cdim]
    shifted_t = jnp.sum(shifted * onehot, axis=1, keepdims=True)  # [tn, 1]

    # focal modulation only on the gathered class: O(TILE_N) transcendentals
    logpt_t = shifted_t - lse                              # [tn, 1]
    pt_t = jnp.exp(logpt_t)
    omp = 1.0 - pt_t
    focal_t = (omp * omp) * logpt_t                        # (1 - pt)^2 * logpt

    # mask padding rows out of the reduction, accumulate -logpt_focal
    row_ids = i * tn + lax.broadcasted_iota(jnp.int32, (tn, 1), 0)
    row_ok = (row_ids < n_valid).astype(jnp.float32)
    acc_ref[0] = acc_ref[0] - jnp.sum(focal_t * row_ok)

    @pl.when(i == pl.num_programs(0) - 1)
    def _finalize():
        # nll_loss reduction='mean' with weight=None; 1/N as a constant multiply.
        out_ref[0] = acc_ref[0] * jnp.float32(inv_n)


def focal_loss(logits, target, mask=None):
    """Forward of FocalLoss(gamma=2, weight=None).

    logits: [N, C] float, target: [N] int class indices.
    `mask` is accepted for API parity with the PyTorch module but ignored,
    exactly as the reference forward ignores it.
    """
    del mask
    n, c = logits.shape

    # lane-dense class axis (multiple of 128); padded lanes are masked in-kernel.
    c_pad = _round_up(c, 128)

    # Row tile: multiple of 8 sublanes; keep a double-buffered f32 tile small
    # enough for every generation's scoped VMEM (v7x: 64 MiB phys / 32 MiB def).
    rows_budget = max(8, ((4 * 1024 * 1024) // (c_pad * 4)) // 8 * 8)
    tile_n = int(min(1024, rows_budget, _round_up(n, 8)))
    n_pad = _round_up(n, tile_n)
    num_tiles = n_pad // tile_n

    logits_p = jnp.pad(logits.astype(jnp.float32),
                       ((0, n_pad - n), (0, c_pad - c)))
    target_p = jnp.pad(target.astype(jnp.int32),
                       ((0, n_pad - n),)).reshape(n_pad, 1)

    kernel = functools.partial(_focal_loss_kernel,
                               n_valid=n, c_valid=c, inv_n=1.0 / n)

    # TODO(synk): per-class `weight` (weighted mean) not implemented; module default is None.
    # TODO(synk): for vocab-scale C, add a class-axis grid dim with an online logsumexp.
    # TODO(synk): on v7x, per-tile partial sums with a "parallel" row axis would shard
    # across both TensorCores; the single SMEM accumulator keeps this axis "arbitrary".
    out = pl.pallas_call(
        kernel,
        out_shape=jax.ShapeDtypeStruct((1,), jnp.float32),
        grid_spec=pltpu.PrefetchScalarGridSpec(
            num_scalar_prefetch=0,
            grid=(num_tiles,),
            in_specs=[
                pl.BlockSpec((tile_n, c_pad), lambda i: (i, 0)),
                pl.BlockSpec((tile_n, 1), lambda i: (i, 0)),
            ],
            out_specs=pl.BlockSpec(memory_space=pltpu.MemorySpace.SMEM),
            scratch_shapes=[pltpu.SMEM((1,), jnp.float32)],
        ),
        compiler_params=pltpu.CompilerParams(
            dimension_semantics=("arbitrary",),
        ),
    )(logits_p, target_p)
    return out[0]


def _reference(logits, target):
    # pure-JAX reference for sanity check
    logpt = jax.nn.log_softmax(logits, axis=1)
    pt = jnp.exp(logpt)
    focal = ((1.0 - pt) ** GAMMA) * logpt
    picked = jnp.take_along_axis(focal, target[:, None].astype(jnp.int32), axis=1)[:, 0]
    return jnp.mean(-picked)


if __name__ == "__main__":
    key = jax.random.PRNGKey(0)
    k1, k2 = jax.random.split(key)

    N, C = 8, 4  # small shapes consistent with [N, C] logits
    logits = jax.random.normal(k1, (N, C), dtype=jnp.float32)
    target = jax.random.randint(k2, (N,), 0, C, dtype=jnp.int32)
    mask = jnp.ones((N,), dtype=jnp.float32)  # unused by the reference forward

    loss = focal_loss(logits, target, mask)
    jax.block_until_ready(loss)

    ref = _reference(logits, target)
    assert jnp.allclose(loss, ref, atol=1e-5, rtol=1e-5), (loss, ref)
    print("KERNEL_OK")
</pallas_src>

<mosaic_0001>
module attributes {stable_mosaic.version = 11 : i64} {
  func.func @_focal_loss_kernel(%arg0: i32, %arg1: memref<8x128xf32, #tpu.memory_space<vmem>>, %arg2: memref<8x1xi32, #tpu.memory_space<vmem>>, %arg3: memref<1xf32, #tpu.memory_space<smem>>, %arg4: memref<1xf32, #tpu.memory_space<smem>>) attributes {dimension_semantics = [#tpu.dimension_semantics<arbitrary>], iteration_bounds = array<i64: 1>, scalar_prefetch = 0 : i64, scratch_operands = 1 : i64, tpu.core_type = #tpu.core_type<tc>, window_params = [{transform_indices = @transform_0, window_bounds = array<i64: 8, 128>}, {transform_indices = @transform_1, window_bounds = array<i64: 8, 1>}, {transform_indices = @transform_2, window_bounds = array<i64: 1>}]} {
    %c0_i32 = arith.constant 0 : i32
    %0 = arith.cmpi eq, %arg0, %c0_i32 : i32
    %1 = arith.extui %0 : i1 to i32
    %c0_i32_0 = arith.constant 0 : i32
    %2 = arith.cmpi ne, %1, %c0_i32_0 : i32
    scf.if %2 {
      %cst_15 = arith.constant 0.000000e+00 : f32
      %c0_16 = arith.constant 0 : index
      %52 = memref.load %arg4[%c0_16] : memref<1xf32, #tpu.memory_space<smem>>
      memref.store %cst_15, %arg4[%c0_16] : memref<1xf32, #tpu.memory_space<smem>>
    } else {
    }
    %c0 = arith.constant 0 : index
    %c0_1 = arith.constant 0 : index
    %3 = vector.load %arg1[%c0, %c0_1] : memref<8x128xf32, #tpu.memory_space<vmem>>, vector<8x128xf32>
    %c0_2 = arith.constant 0 : index
    %c0_3 = arith.constant 0 : index
    %4 = vector.load %arg2[%c0_2, %c0_3] : memref<8x1xi32, #tpu.memory_space<vmem>>, vector<8x1xi32>
    %5 = tpu.iota {dimensions = array<i32: 1>} : vector<8x128xi32>
    %c4_i32 = arith.constant 4 : i32
    %6 = vector.broadcast %c4_i32 : i32 to vector<8x128xi32>
    %7 = arith.cmpi slt, %5, %6 : vector<8x128xi32>
    %cst = arith.constant -1.000000e+30 : f32
    %8 = vector.broadcast %cst : f32 to vector<8x128xf32>
    %9 = arith.select %7, %3, %8 : vector<8x128xi1>, vector<8x128xf32>
    %cst_4 = arith.constant dense<0xFF800000> : vector<8xf32>
    %10 = vector.multi_reduction <maximumf>, %9, %cst_4 [1] : vector<8x128xf32> to vector<8xf32>
    %11 = vector.shape_cast %10 : vector<8xf32> to vector<8x1xf32>
    %12 = vector.broadcast %11 : vector<8x1xf32> to vector<8x128xf32>
    %13 = arith.subf %9, %12 : vector<8x128xf32>
    %14 = math.exp %13 : vector<8x128xf32>
    %cst_5 = arith.constant 0.000000e+00 : f32
    %15 = vector.broadcast %cst_5 : f32 to vector<8x128xf32>
    %16 = arith.select %7, %14, %15 : vector<8x128xi1>, vector<8x128xf32>
    %cst_6 = arith.constant dense<0.000000e+00> : vector<8xf32>
    %17 = vector.multi_reduction <add>, %16, %cst_6 [1] : vector<8x128xf32> to vector<8xf32>
    %18 = vector.shape_cast %17 : vector<8xf32> to vector<8x1xf32>
    %19 = math.log %18 : vector<8x1xf32>
    %20 = vector.broadcast %4 : vector<8x1xi32> to vector<8x128xi32>
    %21 = arith.cmpi eq, %5, %20 : vector<8x128xi32>
    %22 = arith.extui %21 : vector<8x128xi1> to vector<8x128xi32>
    %23 = arith.sitofp %22 : vector<8x128xi32> to vector<8x128xf32>
    %24 = arith.mulf %13, %23 : vector<8x128xf32>
    %cst_7 = arith.constant dense<0.000000e+00> : vector<8xf32>
    %25 = vector.multi_reduction <add>, %24, %cst_7 [1] : vector<8x128xf32> to vector<8xf32>
    %26 = vector.shape_cast %25 : vector<8xf32> to vector<8x1xf32>
    %27 = arith.subf %26, %19 : vector<8x1xf32>
    %28 = math.exp %27 : vector<8x1xf32>
    %cst_8 = arith.constant 1.000000e+00 : f32
    %29 = vector.broadcast %cst_8 : f32 to vector<8x1xf32>
    %30 = arith.subf %29, %28 : vector<8x1xf32>
    %31 = arith.mulf %30, %30 : vector<8x1xf32>
    %32 = arith.mulf %31, %27 : vector<8x1xf32>
    %c8_i32 = arith.constant 8 : i32
    %33 = arith.muli %arg0, %c8_i32 : i32
    %34 = tpu.iota {dimensions = array<i32: 0>} : vector<8x1xi32>
    %35 = vector.broadcast %33 : i32 to vector<8x1xi32>
    %36 = arith.addi %35, %34 : vector<8x1xi32>
    %c8_i32_9 = arith.constant 8 : i32
    %37 = vector.broadcast %c8_i32_9 : i32 to vector<8x1xi32>
    %38 = arith.cmpi slt, %36, %37 : vector<8x1xi32>
    %39 = arith.extui %38 : vector<8x1xi1> to vector<8x1xi32>
    %40 = arith.sitofp %39 : vector<8x1xi32> to vector<8x1xf32>
    %c0_10 = arith.constant 0 : index
    %41 = memref.load %arg4[%c0_10] : memref<1xf32, #tpu.memory_space<smem>>
    %42 = arith.mulf %32, %40 : vector<8x1xf32>
    %43 = vector.shape_cast %42 : vector<8x1xf32> to vector<1x8x1xf32>
    %cst_11 = arith.constant dense<0.000000e+00> : vector<1xf32>
    %44 = vector.multi_reduction <add>, %43, %cst_11 [1, 2] : vector<1x8x1xf32> to vector<1xf32>
    %45 = vector.shape_cast %44 : vector<1xf32> to vector<1x1x1xf32>
    %46 = vector.extract %45[0, 0, 0] : f32 from vector<1x1x1xf32>
    %47 = arith.subf %41, %46 : f32
    %c0_12 = arith.constant 0 : index
    %48 = memref.load %arg4[%c0_12] : memref<1xf32, #tpu.memory_space<smem>>
    memref.store %47, %arg4[%c0_12] : memref<1xf32, #tpu.memory_space<smem>>
    %c0_i32_13 = arith.constant 0 : i32
    %49 = arith.cmpi eq, %arg0, %c0_i32_13 : i32
    %50 = arith.extui %49 : i1 to i32
    %c0_i32_14 = arith.constant 0 : i32
    %51 = arith.cmpi ne, %50, %c0_i32_14 : i32
    scf.if %51 {
      %c0_15 = arith.constant 0 : index
      %52 = memref.load %arg4[%c0_15] : memref<1xf32, #tpu.memory_space<smem>>
      %cst_16 = arith.constant 1.250000e-01 : f32
      %53 = arith.mulf %52, %cst_16 : f32
      %c0_17 = arith.constant 0 : index
      %54 = memref.load %arg3[%c0_17] : memref<1xf32, #tpu.memory_space<smem>>
      memref.store %53, %arg3[%c0_17] : memref<1xf32, #tpu.memory_space<smem>>
    } else {
    }
    return
  }
  func.func @transform_0(%arg0: i32) -> (i32, i32) {
    %c0_i32 = arith.constant 0 : i32
    %c0_i32_0 = arith.constant 0 : i32
    return %arg0, %c0_i32 : i32, i32
  }
  func.func @transform_1(%arg0: i32) -> (i32, i32) {
    %c0_i32 = arith.constant 0 : i32
    %c0_i32_0 = arith.constant 0 : i32
    return %arg0, %c0_i32 : i32, i32
  }
  func.func @transform_2(%arg0: i32) -> i32 {
    %c0_i32 = arith.constant 0 : i32
    %c0_i32_0 = arith.constant 0 : i32
    return %c0_i32 : i32
  }
}

</mosaic_0001>

<llo_original>
// kernel: tpu_custom_call.1
$region0: #{tpu_custom_call.1}
  #allocation0 [shape = 'u32[]', space=smem, size = 0x4, offset = 0x4, fixed_abs, tag = 'smem constant byte address 0x4 - core index']
  #allocation1 [shape = 'u32[144,128]{1,0:T(1,128)}', space=vmem, size = 0x12000, scoped, tag = 'internal scratch']
  #allocation2 [shape = 'f32[1]{0:T(128)}', space=smem, size = 0x200, scoped, tag = 'scratch operand']
  %s0 = inlined_call_operand.vmem [shape: f32[8,128], index: 0, kind: input, shape index: {}]
  %s1 = inlined_call_operand.vmem [shape: s32[8,1], index: 1, kind: input, shape index: {}]
  %s2 = inlined_call_operand.hbm [shape: f32[1], index: 2, kind: output, shape index: {}]
  %s3 = sld [smem:[#allocation0]]
  $region26: #{tpu_custom_call.1} parent=0
    _
  %s5 = ssub.s32 1, %s3
  %s6 = scalar_select 0, %s5, %s3
  $region1: #{tpu_custom_call.1} parent=0
    #allocation3 [shape = 'u8[512]{0}', space=smem, size = 0x200, scoped, tag = 'output window, operand 0, single buffered']
    #allocation4 [shape = 's32[1]{0}', space=sflag, size = 0x4, scoped, tag = 'scoped memory for tpu_custom_call.1']
    %7 = vsyncpa [#allocation4], 0
    // Predicated region
    $region2: #{tpu_custom_call.1} parent=1 // pred_check
      _
    $region3: #{tpu_custom_call.1} parent=1 // pred_check_branch
      %9 = sbr.rel (0) target = $region5
    $region4: #{tpu_custom_call.1} parent=1 // pred_region
      _
    $region5: #{tpu_custom_call.1} parent=1 // pred_fallthru
      _
    // Predicated region
    $region6: #{tpu_custom_call.1} parent=1 // pred_check
      _
    $region7: #{tpu_custom_call.1} parent=1 // pred_check_branch
      %11 = sbr.rel (0) target = $region9
    $region8: #{tpu_custom_call.1} parent=1 // pred_region
      _
    $region9: #{tpu_custom_call.1} parent=1 // pred_fallthru
      _
    %p12 = scmp.eq.s32.totalorder 0, 0
    // Predicated region
    $region10: #{tpu_custom_call.1} parent=1 // pred_check
      %p13 = pneg %p12
    $region11: #{tpu_custom_call.1} parent=1 // pred_check_branch
      %15 = sbr.rel (%p13) target = $region13
    $region12: #{tpu_custom_call.1} parent=1 // pred_region
      %s16 = scalar_lea.smem [#allocation2], 0
      %17 = sst [smem:[%s16]] 0.0
    $region13: #{tpu_custom_call.1} parent=1 // pred_fallthru
      _
    %v18 = vld [vmem:[%s0] sm:$0xff]
    %v19 = vld [vmem:[%s1] sm:$0xff]
    %v20 = vlaneseq
    %v21 = vand.u32 %v20, 127
    %vm22 = vcmp.lt.s32.totalorder %v21, 4
    %v23 = vsel %vm22, %v18, -1e+30
    %24 = vmax.xlane.f32.xlu0 %v23
    %v25 = vpop.xlane.xlu0 %24
    %v26 = vsub.f32 %v23, %v25
    %v27 = vmul.f32 %v26, 1.442695
    %v28 = vpow.pop %v27
    %v29 = vsel %vm22, %v28, 0.0
    %30 = vadd.xlane.f32.xlu0 %v29
    %v31 = vpop.xlane.xlu0 %30
    %v32 = vlog2.pop %v31
    %v33 = vmul.f32 %v32, 0.6931472
    %34 = vset.pattern.permute.xlu0 0
    %35 = vperm.xlu0 %34, %v19
    %v36 = vpop.permute.xlu0 %35
    %vm37 = vcmp.eq.s32.totalorder %v21, %v36
    %v38 = vsel %vm37, 1, 0
    %v39 = vcvt.s32.f32 %v38
    %v40 = vmul.f32 %v26, %v39
    %41 = vadd.xlane.f32.xlu0 %v40
    %v42 = vpop.xlane.xlu0 %41
    %v43 = vsub.f32 %v42, %v33
    %v44 = vmul.f32 %v43, 1.442695
    %v45 = vpow.pop %v44
    %v46 = vsub.f32 1.0, %v45
    %v47 = vmul.f32 %v46, %v46
    %v48 = vmul.f32 %v47, %v43
    %s49 = smul.u32 0, 8
    %v50 = vlaneseq
    %v51 = vshrl.u32 %v50, 7
    %v52 = vstv %s49
    %v53 = vadd.s32 %v52, %v51
    %vm54 = vcmp.lt.s32.totalorder %v53, 8
    %v55 = vsel %vm54, 1, 0
    %v56 = vcvt.s32.f32 %v55
    %s57 = sld [smem:[#allocation2]]
    %v58 = vmul.f32 %v48, %v56
    %vm59 = vcmask 7168
    %v60 = vsel %vm59, %v58, 0.0
    %61 = vadd.xlane.f32.xlu0 %v60
    %v62 = vpop.xlane.xlu0 %61
    %v63 = vrot.slane %v62, 4
    %v64 = vadd.f32 %v62, %v63
    %v65 = vrot.slane %v64, 2
    %v66 = vadd.f32 %v64, %v65
    %v67 = vrot.slane %v66, 1
    %v68 = vadd.f32 %v66, %v67
    %s69 = vtos %v68
    %s70 = ssub.f32 %s57, %s69
    %s71 = scalar_lea.smem [#allocation2], 0
    %72 = sst [smem:[%s71]] %s70
    // Predicated region
    $region14: #{tpu_custom_call.1} parent=1 // pred_check
      %p73 = pneg %p12
    $region15: #{tpu_custom_call.1} parent=1 // pred_check_branch
      %75 = sbr.rel (%p73) target = $region17
    $region16: #{tpu_custom_call.1} parent=1 // pred_region
      %s76 = sld [smem:[#allocation2]]
      %s77 = smul.f32 %s76, 0.125
      %s78 = scalar_lea.smem [#allocation3], 0
      %79 = sst [smem:[%s78]] %s77
    $region17: #{tpu_custom_call.1} parent=1 // pred_fallthru
      _
    // Predicated region
    $region18: #{tpu_custom_call.1} parent=1 // pred_check
      _
    $region19: #{tpu_custom_call.1} parent=1 // pred_check_branch
      %81 = sbr.rel (0) target = $region21
    $region20: #{tpu_custom_call.1} parent=1 // pred_region
      %s83 = ssub.s32 16, 16
      %84 = vsyncadd [#allocation4], %s83
      %87 = dma.smem_to_hbm [#allocation3], 16, %s2, [#allocation4]
    $region21: #{tpu_custom_call.1} parent=1 // pred_fallthru
      _
    // Predicated region
    $region22: #{tpu_custom_call.1} parent=1 // pred_check
      _
    $region23: #{tpu_custom_call.1} parent=1 // pred_check_branch
      %89 = sbr.rel (0) target = $region25
    $region24: #{tpu_custom_call.1} parent=1 // pred_region
      %90 = dma.done [#allocation4], 16
    $region25: #{tpu_custom_call.1} parent=1 // pred_fallthru
      _
    %91 = sfence
    %92 = vsyncpa [#allocation4], 1

</llo_original>
